<compile_context>
chip_gen: v6e
topology: v6e:2x2x1
jax: 0.10.0
libtpu: 0.0.40
codegen_flags: <defaults>
</compile_context>

<pallas_src>
import jax
import jax.numpy as jnp
from jax.experimental import pallas as pl
from jax.experimental.pallas import tpu as pltpu


def _round_up(n, m):
    return ((n + m - 1) // m) * m


def _ffd_phi_kernel(x_ref, w1_ref, b1_ref, w2t_ref, b2_ref, o_ref):
    # x.float() in the torch module
    x = x_ref[...].astype(jnp.float32)                              # (TB, 13)

    # hidden = sigmoid(x @ W1 + b1)   -- MXU matmul, EUP sigmoid
    h = jnp.dot(x, w1_ref[...], preferred_element_type=jnp.float32)  # (TB, 100)
    h = jax.nn.sigmoid(h + b1_ref[...])

    # predict = h @ W2 + b2, computed as W2^T contracted against h so the
    # result comes out lane-dense as (1, TB) with no in-kernel transpose.
    out_t = jax.lax.dot_general(
        w2t_ref[...], h,
        dimension_numbers=(((1,), (1,)), ((), ())),
        preferred_element_type=jnp.float32)                         # (1, TB)
    out_t = out_t + b2_ref[0, 0]                                    # SMEM scalar

    o_ref[...] = out_t.reshape(o_ref.shape).astype(o_ref.dtype)     # (1,1,TB)


def ffd_phi_forward(x, w1, b1, w2, b2, *, tb=1024):
    """Pallas path. x: (B, 13) float32 -> (B, 1) float32."""
    B, f_in = x.shape
    assert f_in == 13 and w1.shape == (13, 100) and w2.shape == (100, 1)

    tb = _round_up(min(tb, _round_up(B, 8)), 8)     # sublane-aligned batch tile
    grid = pl.cdiv(B, tb)
    b_pad = grid * tb
    if b_pad != B:                                  # pad tail tile with zeros
        x = jnp.pad(x, ((0, b_pad - B), (0, 0)))

    w2t = w2.reshape(1, 100)                        # (100,1) -> (1,100), free

    out = pl.pallas_call(
        _ffd_phi_kernel,
        grid=(grid,),
        out_shape=jax.ShapeDtypeStruct((grid, 1, tb), jnp.float32),
        in_specs=[
            # streamed batch tile
            pl.BlockSpec((tb, 13), lambda i: (i, 0)),
            # weights / b1: constant index_map -> fetched once, VMEM-resident
            pl.BlockSpec((13, 100), lambda i: (0, 0)),
            pl.BlockSpec((1, 100), lambda i: (0, 0)),
            pl.BlockSpec((1, 100), lambda i: (0, 0)),
            # b2: scalar in SMEM (no padded VMEM tile, no vector DMA)
            pl.BlockSpec((1, 1), lambda i: (0, 0),
                         memory_space=pltpu.MemorySpace.SMEM),
        ],
        out_specs=pl.BlockSpec((1, 1, tb), lambda i: (i, 0, 0)),
        compiler_params=pltpu.CompilerParams(
            dimension_semantics=("parallel",),      # megacore split on v7x
            vmem_limit_bytes=32 * 1024 * 1024,      # fits v5e/v6e/v7x budgets
        ),
    )(x, w1, b1, w2t, b2)

    # (G, 1, TB) tiles are laid out in batch order -> flat (B,) -> (B, 1)
    return out.reshape(b_pad)[:B].reshape(B, 1)


MIN_PALLAS_BATCH = 256


def ffd_phi(x, w1, b1, w2, b2, *, tb=1024):
    """Dispatcher: tiny batches aren't worth a pallas_call round-trip."""
    if x.shape[0] < MIN_PALLAS_BATCH:
        return reference_forward(x, w1, b1, w2, b2)
    return ffd_phi_forward(x, w1, b1, w2, b2, tb=tb)


def init_params(key):
    """nn.Linear-shaped params, stored transposed ([in, out])."""
    k1, k2, k3, k4 = jax.random.split(key, 4)
    lim1 = 1.0 / jnp.sqrt(13.0)
    lim2 = 1.0 / jnp.sqrt(100.0)
    w1 = jax.random.uniform(k1, (13, 100), jnp.float32, -lim1, lim1)
    b1 = jax.random.uniform(k2, (1, 100), jnp.float32, -lim1, lim1)
    w2 = jax.random.uniform(k3, (100, 1), jnp.float32, -lim2, lim2)
    b2 = jax.random.uniform(k4, (1, 1), jnp.float32, -lim2, lim2)
    return w1, b1, w2, b2


def reference_forward(x, w1, b1, w2, b2):
    h = jax.nn.sigmoid(x.astype(jnp.float32) @ w1 + b1)
    return h @ w2 + b2


if __name__ == "__main__":
    key = jax.random.PRNGKey(0)
    kx, kp = jax.random.split(key)

    # Small demo shapes chosen so the grid has multiple steps and the
    # pad/slice tail path is exercised: cdiv(200, 64) = 4 tiles, pad to 256.
    batch, tb = 200, 64
    x = jax.random.normal(kx, (batch, 13), jnp.float32)
    w1, b1, w2, b2 = init_params(kp)

    out = ffd_phi_forward(x, w1, b1, w2, b2, tb=tb)
    out = jax.block_until_ready(out)

    ref = reference_forward(x, w1, b1, w2, b2)
    assert out.shape == (batch, 1)
    assert jnp.allclose(out, ref, atol=1e-5, rtol=1e-5), "mismatch vs reference"

    # Dispatcher sanity: tiny batches (the torch toy usage) skip Pallas.
    x_small = jax.random.normal(kx, (8, 13), jnp.float32)
    small = jax.block_until_ready(ffd_phi(x_small, w1, b1, w2, b2))
    assert small.shape == (8, 1)

    print("KERNEL_OK")
</pallas_src>

<mosaic_0001>
module attributes {stable_mosaic.version = 11 : i64} {
  func.func @_ffd_phi_kernel(%arg0: i32, %arg1: memref<64x13xf32, #tpu.memory_space<vmem>>, %arg2: memref<13x100xf32, #tpu.memory_space<vmem>>, %arg3: memref<1x100xf32, #tpu.memory_space<vmem>>, %arg4: memref<1x100xf32, #tpu.memory_space<vmem>>, %arg5: memref<1x1xf32, #tpu.memory_space<smem>>, %arg6: memref<1x1x64xf32, #tpu.memory_space<vmem>>) attributes {dimension_semantics = [#tpu.dimension_semantics<parallel>], iteration_bounds = array<i64: 4>, scalar_prefetch = 0 : i64, scratch_operands = 0 : i64, tpu.core_type = #tpu.core_type<tc>, window_params = [{transform_indices = @transform_0, window_bounds = array<i64: 64, 13>}, {pipeline_mode = #tpu.pipeline_mode<synchronous>, transform_indices = @transform_1, window_bounds = array<i64: 13, 100>}, {pipeline_mode = #tpu.pipeline_mode<synchronous>, transform_indices = @transform_2, window_bounds = array<i64: 1, 100>}, {pipeline_mode = #tpu.pipeline_mode<synchronous>, transform_indices = @transform_3, window_bounds = array<i64: 1, 100>}, {transform_indices = @transform_4, window_bounds = array<i64: 1, 1>}, {transform_indices = @transform_5, window_bounds = array<i64: 1, 1, 64>}]} {
    %c0 = arith.constant 0 : index
    %c0_0 = arith.constant 0 : index
    %0 = vector.load %arg1[%c0, %c0_0] : memref<64x13xf32, #tpu.memory_space<vmem>>, vector<64x13xf32>
    %c0_1 = arith.constant 0 : index
    %c0_2 = arith.constant 0 : index
    %1 = vector.load %arg2[%c0_1, %c0_2] : memref<13x100xf32, #tpu.memory_space<vmem>>, vector<13x100xf32>
    %cst = arith.constant dense<0.000000e+00> : vector<64x100xf32>
    %2 = tpu.matmul %0, %1, %cst {dimension_numbers = #tpu.dot_dimension_numbers<[1], [0], [0], [1], [0, 0, 1, 1], [], []>} : vector<64x13xf32>, vector<13x100xf32>, vector<64x100xf32> -> vector<64x100xf32>
    %c0_3 = arith.constant 0 : index
    %c0_4 = arith.constant 0 : index
    %3 = vector.load %arg3[%c0_3, %c0_4] : memref<1x100xf32, #tpu.memory_space<vmem>>, vector<1x100xf32>
    %4 = vector.broadcast %3 : vector<1x100xf32> to vector<64x100xf32>
    %5 = arith.addf %2, %4 : vector<64x100xf32>
    %6 = arith.negf %5 : vector<64x100xf32>
    %7 = math.exp %6 : vector<64x100xf32>
    %cst_5 = arith.constant 1.000000e+00 : f32
    %8 = vector.broadcast %cst_5 : f32 to vector<64x100xf32>
    %9 = arith.addf %8, %7 : vector<64x100xf32>
    %10 = arith.divf %8, %9 : vector<64x100xf32>
    %c0_6 = arith.constant 0 : index
    %c0_7 = arith.constant 0 : index
    %11 = vector.load %arg4[%c0_6, %c0_7] : memref<1x100xf32, #tpu.memory_space<vmem>>, vector<1x100xf32>
    %cst_8 = arith.constant dense<0.000000e+00> : vector<1x64xf32>
    %12 = tpu.matmul %11, %10, %cst_8 {dimension_numbers = #tpu.dot_dimension_numbers<[1], [1], [0], [0], [0, 0, 1, 0], [], []>} : vector<1x100xf32>, vector<64x100xf32>, vector<1x64xf32> -> vector<1x64xf32>
    %c0_9 = arith.constant 0 : index
    %c0_10 = arith.constant 0 : index
    %13 = memref.load %arg5[%c0_9, %c0_10] : memref<1x1xf32, #tpu.memory_space<smem>>
    %14 = vector.broadcast %13 : f32 to vector<1x64xf32>
    %15 = arith.addf %12, %14 : vector<1x64xf32>
    %16 = vector.shape_cast %15 : vector<1x64xf32> to vector<1x1x64xf32>
    %c0_11 = arith.constant 0 : index
    %c0_12 = arith.constant 0 : index
    %c0_13 = arith.constant 0 : index
    %17 = vector.load %arg6[%c0_11, %c0_12, %c0_13] : memref<1x1x64xf32, #tpu.memory_space<vmem>>, vector<1x1x64xf32>
    tpu.vector_store %arg6[%c0_11, %c0_12, %c0_13], %16 {strides = array<i32>} : memref<1x1x64xf32, #tpu.memory_space<vmem>>, vector<1x1x64xf32>,
    return
  }
  func.func @transform_0(%arg0: i32) -> (i32, i32) {
    %c0_i32 = arith.constant 0 : i32
    %c0_i32_0 = arith.constant 0 : i32
    return %arg0, %c0_i32 : i32, i32
  }
  func.func @transform_1(%arg0: i32) -> (i32, i32) {
    %c0_i32 = arith.constant 0 : i32
    %c0_i32_0 = arith.constant 0 : i32
    %c0_i32_1 = arith.constant 0 : i32
    return %c0_i32, %c0_i32_0 : i32, i32
  }
  func.func @transform_2(%arg0: i32) -> (i32, i32) {
    %c0_i32 = arith.constant 0 : i32
    %c0_i32_0 = arith.constant 0 : i32
    %c0_i32_1 = arith.constant 0 : i32
    return %c0_i32, %c0_i32_0 : i32, i32
  }
  func.func @transform_3(%arg0: i32) -> (i32, i32) {
    %c0_i32 = arith.constant 0 : i32
    %c0_i32_0 = arith.constant 0 : i32
    %c0_i32_1 = arith.constant 0 : i32
    return %c0_i32, %c0_i32_0 : i32, i32
  }
  func.func @transform_4(%arg0: i32) -> (i32, i32) {
    %c0_i32 = arith.constant 0 : i32
    %c0_i32_0 = arith.constant 0 : i32
    %c0_i32_1 = arith.constant 0 : i32
    return %c0_i32, %c0_i32_0 : i32, i32
  }
  func.func @transform_5(%arg0: i32) -> (i32, i32, i32) {
    %c0_i32 = arith.constant 0 : i32
    %c0_i32_0 = arith.constant 0 : i32
    %c0_i32_1 = arith.constant 0 : i32
    return %arg0, %c0_i32, %c0_i32_0 : i32, i32, i32
  }
}

</mosaic_0001>

<llo_original>
// kernel: tpu_custom_call.1
$region0: #{tpu_custom_call.1}
  #allocation0 [shape = 'u32[]', space=smem, size = 0x4, offset = 0x4, fixed_abs, tag = 'smem constant byte address 0x4 - core index']
  #allocation1 [shape = 'u32[144,128]{1,0:T(1,128)}', space=vmem, size = 0x12000, scoped, tag = 'internal scratch']
  #allocation2 [shape = 'f32[1,1]{1,0:T(1,128)S(6)}', space=smem, size = 0x200, scoped, tag = 'scoped memory for tpu_custom_call.1']
  %s0 = inlined_call_operand.vmem [shape: f32[256,13], index: 0, kind: input, shape index: {}]
  %s1 = inlined_call_operand.vmem [shape: f32[13,100], index: 1, kind: input, shape index: {}]
  %s2 = inlined_call_operand.vmem [shape: f32[1,100], index: 2, kind: input, shape index: {}]
  %s3 = inlined_call_operand.vmem [shape: f32[1,100], index: 3, kind: input, shape index: {}]
  %s4 = inlined_call_operand.<no memory space> [shape: f32[1,1], index: 4, kind: input, shape index: {}]
  %s5 = inlined_call_operand.hbm [shape: f32[4,1,64], index: 5, kind: output, shape index: {}]
  %s6 = sld [smem:[#allocation0]]
  $region53: #{tpu_custom_call.1} parent=0
    _
  %s8 = ssub.s32 1, %s6
  %s9 = scalar_select 0, %s8, %s6
  %10 = sst [smem:[#allocation2]] %s4
  $region1: #{tpu_custom_call.1} parent=0
    #allocation3 [shape = 'u8[1024]{0}', space=vmem, size = 0x400, scoped, tag = 'output window, operand 0']
    #allocation4 [shape = 's32[2]{0}', space=sflag, size = 0x8, scoped, tag = 'scoped memory for tpu_custom_call.1']
    %11 = vsyncpa [#allocation4], 0
    %s12 = scalar_lea.sflag [#allocation4], 1
    %13 = vsyncpa %s12, 0
    loop: start=0, step=1, limit=6
    $region2: #{tpu_custom_call.1} parent=1 // loop_pre_header
      _
    $region3: #{tpu_custom_call.1} parent=1 // loop_header
      %s15 = sphi 0, %s19
      %p16 = scmp.ge.s32.totalorder %s15, 6
      %s25 = sphi 0, %s27
      %s28 = sphi 0, %s25
      %s29 = sphi 0, %s28
      %s45 = sphi 0, %s29
      %s49 = sphi 0, %s49
      %s51 = sphi 0, %s49
      %s52 = sphi 0, %s51
      %s66 = sphi 0, %s52
      %s70 = sphi 0, %s70
      %s72 = sphi 0, %s70
      %s73 = sphi 0, %s72
      %s87 = sphi 0, %s73
      %s91 = sphi 0, %s91
      %s93 = sphi 0, %s91
      %s94 = sphi 0, %s93
      %s108 = sphi 0, %s94
      %s112 = sphi 0, %s112
      %s114 = sphi 0, %s112
      %s115 = sphi 0, %s114
      %s129 = sphi 0, %s115
      %s135 = sphi 0, %s137
      %s138 = sphi 0, %s135
      %s139 = sphi 0, %s138
      %s155 = sphi 0, %s139
    $region4: #{tpu_custom_call.1} parent=1 // loop_header_branch
      %18 = sbr.rel (%p16) target = $region8
    $region5: #{tpu_custom_call.1} parent=1 // loop_body
      %s20 = ssub.s32 %s15, 1
      %s21 = ssub.s32 %s15, 2
      %s22 = sadd.s32 %s15, 1
      %s23 = ssub.s32 %s15, %s22
      %p24 = scmp.eq.s32.totalorder %s23, 0
      %s26 = sadd.s32 %s25, 1
      %s27 = scalar_select %p24, %s25, %s26
      %p30 = pneg %p24
      %p31 = scmp.eq.s32.totalorder %s15, 3
      %p32 = por %p30, %p31
      %p33 = scmp.ne.s32.totalorder %s25, %s28
      %p34 = scmp.eq.s32.totalorder %s15, 0
      %p35 = por %p33, %p34
      %p36 = scmp.ne.s32.totalorder %s25, %s28
      %p37 = scmp.eq.s32.totalorder %s20, 3
      %p38 = por %p36, %p37
      %p39 = scmp.ne.s32.totalorder %s28, %s29
      %p40 = scmp.eq.s32.totalorder %s20, 0
      %p41 = por %p39, %p40
      %p42 = scmp.ne.s32.totalorder %s28, %s29
      %p43 = scmp.eq.s32.totalorder %s21, 3
      %p44 = por %p42, %p43
      %p46 = scmp.ne.s32.totalorder %s29, %s45
      %p47 = scmp.eq.s32.totalorder %s21, 0
      %p48 = por %p46, %p47
      %s50 = sadd.s32 %s49, 1
      %p53 = scmp.eq.s32.totalorder %s15, 3
      %p54 = scmp.ne.s32.totalorder %s49, %s51
      %p55 = scmp.eq.s32.totalorder %s15, 0
      %p56 = por %p54, %p55
      %p57 = scmp.ne.s32.totalorder %s49, %s51
      %p58 = scmp.eq.s32.totalorder %s20, 3
      %p59 = por %p57, %p58
      %p60 = scmp.ne.s32.totalorder %s51, %s52
      %p61 = scmp.eq.s32.totalorder %s20, 0
      %p62 = por %p60, %p61
      %p63 = scmp.ne.s32.totalorder %s51, %s52
      %p64 = scmp.eq.s32.totalorder %s21, 3
      %p65 = por %p63, %p64
      %p67 = scmp.ne.s32.totalorder %s52, %s66
      %p68 = scmp.eq.s32.totalorder %s21, 0
      %p69 = por %p67, %p68
      %s71 = sadd.s32 %s70, 1
      %p74 = scmp.eq.s32.totalorder %s15, 3
      %p75 = scmp.ne.s32.totalorder %s70, %s72
      %p76 = scmp.eq.s32.totalorder %s15, 0
      %p77 = por %p75, %p76
      %p78 = scmp.ne.s32.totalorder %s70, %s72
      %p79 = scmp.eq.s32.totalorder %s20, 3
      %p80 = por %p78, %p79
      %p81 = scmp.ne.s32.totalorder %s72, %s73
      %p82 = scmp.eq.s32.totalorder %s20, 0
      %p83 = por %p81, %p82
      %p84 = scmp.ne.s32.totalorder %s72, %s73
      %p85 = scmp.eq.s32.totalorder %s21, 3
      %p86 = por %p84, %p85
      %p88 = scmp.ne.s32.totalorder %s73, %s87
      %p89 = scmp.eq.s32.totalorder %s21, 0
      %p90 = por %p88, %p89
      %s92 = sadd.s32 %s91, 1
      %p95 = scmp.eq.s32.totalorder %s15, 3
      %p96 = scmp.ne.s32.totalorder %s91, %s93
      %p97 = scmp.eq.s32.totalorder %s15, 0
      %p98 = por %p96, %p97
      %p99 = scmp.ne.s32.totalorder %s91, %s93
      %p100 = scmp.eq.s32.totalorder %s20, 3
      %p101 = por %p99, %p100
      %p102 = scmp.ne.s32.totalorder %s93, %s94
      %p103 = scmp.eq.s32.totalorder %s20, 0
      %p104 = por %p102, %p103
      %p105 = scmp.ne.s32.totalorder %s93, %s94
      %p106 = scmp.eq.s32.totalorder %s21, 3
      %p107 = por %p105, %p106
      %p109 = scmp.ne.s32.totalorder %s94, %s108
      %p110 = scmp.eq.s32.totalorder %s21, 0
      %p111 = por %p109, %p110
      %s113 = sadd.s32 %s112, 1
      %p116 = scmp.eq.s32.totalorder %s15, 3
      %p117 = scmp.ne.s32.totalorder %s112, %s114
      %p118 = scmp.eq.s32.totalorder %s15, 0
      %p119 = por %p117, %p118
      %p120 = scmp.ne.s32.totalorder %s112, %s114
      %p121 = scmp.eq.s32.totalorder %s20, 3
      %p122 = por %p120, %p121
      %p123 = scmp.ne.s32.totalorder %s114, %s115
      %p124 = scmp.eq.s32.totalorder %s20, 0
      %p125 = por %p123, %p124
      %p126 = scmp.ne.s32.totalorder %s114, %s115
      %p127 = scmp.eq.s32.totalorder %s21, 3
      %p128 = por %p126, %p127
      %p130 = scmp.ne.s32.totalorder %s115, %s129
      %p131 = scmp.eq.s32.totalorder %s21, 0
      %p132 = por %p130, %p131
      %s133 = ssub.s32 %s15, %s22
      %p134 = scmp.eq.s32.totalorder %s133, 0
      %s136 = sadd.s32 %s135, 1
      %s137 = scalar_select %p134, %s135, %s136
      %p140 = pneg %p134
      %p141 = scmp.eq.s32.totalorder %s15, 3
      %p142 = por %p140, %p141
      %p143 = scmp.ne.s32.totalorder %s135, %s138
      %p144 = scmp.eq.s32.totalorder %s15, 0
      %p145 = por %p143, %p144
      %p146 = scmp.ne.s32.totalorder %s135, %s138
      %p147 = scmp.eq.s32.totalorder %s20, 3
      %p148 = por %p146, %p147
      %p149 = scmp.ne.s32.totalorder %s138, %s139
      %p150 = scmp.eq.s32.totalorder %s20, 0
      %p151 = por %p149, %p150
      %p152 = scmp.ne.s32.totalorder %s138, %s139
      %p153 = scmp.eq.s32.totalorder %s21, 3
      %p154 = por %p152, %p153
      %p156 = scmp.ne.s32.totalorder %s139, %s155
      %p157 = scmp.eq.s32.totalorder %s21, 0
      %p158 = por %p156, %p157
      %p159 = scmp.le.s32.totalorder 1, %s15
      %p160 = scmp.lt.s32.totalorder %s15, 5
      %p161 = pnand %p159, %p160
      %p162 = pneg %p161
      // Predicated region
      $region9: #{tpu_custom_call.1} parent=5 // pred_check
        _
      $region10: #{tpu_custom_call.1} parent=5 // pred_check_branch
        %164 = sbr.rel (%p161) target = $region12
      $region11: #{tpu_custom_call.1} parent=5 // pred_region
        %s165 = ssub.s32 %s15, 1
        // Predicated region
        $region13: #{tpu_custom_call.1} parent=11 // pred_check
          %p166 = pneg %p62
        $region14: #{tpu_custom_call.1} parent=11 // pred_check_branch
          %168 = sbr.rel (%p166) target = $region16
        $region15: #{tpu_custom_call.1} parent=11 // pred_region
          _
        $region16: #{tpu_custom_call.1} parent=11 // pred_fallthru
          _
        // Predicated region
        $region17: #{tpu_custom_call.1} parent=11 // pred_check
          %p169 = pneg %p83
        $region18: #{tpu_custom_call.1} parent=11 // pred_check_branch
          %171 = sbr.rel (%p169) target = $region20
        $region19: #{tpu_custom_call.1} parent=11 // pred_region
          _
        $region20: #{tpu_custom_call.1} parent=11 // pred_fallthru
          _
        // Predicated region
        $region21: #{tpu_custom_call.1} parent=11 // pred_check
          %p172 = pneg %p104
        $region22: #{tpu_custom_call.1} parent=11 // pred_check_branch
          %174 = sbr.rel (%p172) target = $region24
        $region23: #{tpu_custom_call.1} parent=11 // pred_region
          _
        $region24: #{tpu_custom_call.1} parent=11 // pred_fallthru
          _
        // Predicated region
        $region25: #{tpu_custom_call.1} parent=11 // pred_check
          %p175 = pneg %p125
        $region26: #{tpu_custom_call.1} parent=11 // pred_check_branch
          %177 = sbr.rel (%p175) target = $region28
        $region27: #{tpu_custom_call.1} parent=11 // pred_region
          _
        $region28: #{tpu_custom_call.1} parent=11 // pred_fallthru
          _
      $region12: #{tpu_custom_call.1} parent=5 // pred_fallthru
        _
      %p178 = scmp.lt.s32.totalorder %s15, 4
      // Predicated region
      $region29: #{tpu_custom_call.1} parent=5 // pred_check
        %p179 = pneg %p178
      $region30: #{tpu_custom_call.1} parent=5 // pred_check_branch
        %181 = sbr.rel (%p179) target = $region32
      $region31: #{tpu_custom_call.1} parent=5 // pred_region
        // Predicated region
        $region33: #{tpu_custom_call.1} parent=31 // pred_check
          %p182 = pneg %p35
        $region34: #{tpu_custom_call.1} parent=31 // pred_check_branch
          %184 = sbr.rel (%p182) target = $region36
        $region35: #{tpu_custom_call.1} parent=31 // pred_region
          %s185 = smul.u32 8, %s15
          %p186 = scmp.lt.s32.totalorder %s185, 31
          %s187 = scalar_select %p186, %s185, 31
          %s188 = smul.addr %s187, 8
          %s189 = scalar_lea.vmem %s0, %s188
          %s190 = smul.u32 8, %s15
        $region36: #{tpu_custom_call.1} parent=31 // pred_fallthru
          _
      $region32: #{tpu_custom_call.1} parent=5 // pred_fallthru
        _
      %p191 = scmp.le.s32.totalorder 1, %s15
      %p192 = scmp.lt.s32.totalorder %s15, 5
      %p193 = pnand %p191, %p192
      %p194 = pneg %p193
      // Predicated region
      $region37: #{tpu_custom_call.1} parent=5 // pred_check
        _
      $region38: #{tpu_custom_call.1} parent=5 // pred_check_branch
        %196 = sbr.rel (%p193) target = $region40
      $region39: #{tpu_custom_call.1} parent=5 // pred_region
        %s197 = ssub.s32 %s15, 1
        %s198 = smul.u32 8, %s20
        %p199 = scmp.lt.s32.totalorder %s198, 31
        %s200 = scalar_select %p199, %s198, 31
        %s201 = smul.addr %s200, 8
        %s202 = scalar_lea.vmem %s0, %s201
        %p203 = pneg %p41
        %p204 = pneg %p38
        %p205 = pneg %p62
        %p206 = pneg %p59
        %p207 = pneg %p83
        %p208 = pneg %p80
        %p209 = pneg %p104
        %p210 = pneg %p101
        %p211 = pneg %p125
        %p212 = pneg %p122
        %p213 = pneg %p151
        %p214 = pneg %p148
        %s215 = sand.u32 %s138, 1
        %s216 = scalar_lea.sflag [#allocation4], %s215
        %s217 = sand.u32 %s138, 1
        %s218 = scalar_lea.vmem [#allocation3], %s217
        %s219 = smul.u32 8, %s20
        %p220 = scmp.lt.s32.totalorder %s219, 31
        %s221 = scalar_select %p220, %s219, 31
        %s222 = smul.addr %s221, 8
        %s223 = scalar_lea.vmem %s0, %s222
        %s224 = smul.u32 8, %s20
        %v225 = vld [vmem:[%s223] sm:$0xff]
        %v226 = vld [vmem:[%s223 + $0x8] sm:$0xff]
        %v227 = vld [vmem:[%s223 + $0x10] sm:$0xff]
        %v228 = vld [vmem:[%s223 + $0x18] sm:$0xff]
        %v229 = vld [vmem:[%s223 + $0x20] sm:$0xff]
        %v230 = vld [vmem:[%s223 + $0x28] sm:$0xff]
        %v231 = vld [vmem:[%s223 + $0x30] sm:$0xff]
        %v232 = vld [vmem:[%s223 + $0x38] sm:$0xff]
        %v233 = vld [vmem:[%s1] sm:$0xff]
        %v234 = vld [vmem:[%s1 + $0x8] sm:$0x1f]
        %v235 = vld [vmem:[%s2] sm:$0x1]
        %v237 = vlaneseq
        %v238 = vshrl.u32 %v237, 7
        %v239 = vsub.s32 0, %v238
        %v240 = vrot.slane %v235, %v239
        %vm242 = vcmask 105472
        %v244 = vsel %vm242, %v225, 0
        %v247 = vsel %vm242, %v226, 0
        %v250 = vsel %vm242, %v227, 0
        %v253 = vsel %vm242, %v228, 0
        %v256 = vsel %vm242, %v229, 0
        %v259 = vsel %vm242, %v230, 0
        %v262 = vsel %vm242, %v231, 0
        %v265 = vsel %vm242, %v232, 0
        %vm267 = vcmask 1044480
        %v269 = vsel %vm267, %v234, 0
        %271 = vmatprep.subr.mxu0 0.0
        %272 = vmatpush1.msra.mxu0 0.0
        %273 = vmatprep.subr.mxu0 0.0
        %274 = vmatpush1.msra.mxu0 0.0
        %275 = vmatprep.subr.mxu0 0.0
        %276 = vmatpush1.msra.mxu0 0.0
        %277 = vmatprep.subr.mxu0 0.0
        %278 = vmatpush1.msra.mxu0 0.0
        %279 = vmatprep.subr.mxu0 0.0
        %280 = vmatpush1.msra.mxu0 0.0
        %281 = vmatprep.subr.mxu0 0.0
        %282 = vmatpush1.msra.mxu0 0.0
        %283 = vmatprep.subr.mxu0 0.0
        %284 = vmatpush1.msra.mxu0 0.0
        %285 = vmatprep.subr.mxu0 0.0
        %286 = vmatpush1.msra.mxu0 0.0
        %287 = vmatprep.subr.mxu0 0.0
        %288 = vmatpush1.msra.mxu0 0.0
        %289 = vmatprep.subr.mxu0 0.0
        %290 = vmatpush1.msra.mxu0 0.0
        %291 = vmatprep.subr.mxu0 0.0
        %292 = vmatpush1.msra.mxu0 0.0
        %293 = vmatprep.subr.mxu0 0.0
        %294 = vmatpush1.msra.mxu0 0.0
        %295 = vmatprep.subr.mxu0 0.0
        %296 = vmatpush1.msra.mxu0 0.0
        %297 = vmatprep.subr.mxu0 0.0
        %298 = vmatpush1.msra.mxu0 0.0
        %299 = vmatprep.subr.mxu0 0.0
        %300 = vmatpush1.msra.mxu0 %v269
        %301 = vmatprep.subr.mxu0 0.0
        %302 = vmatpush1.msra.mxu0 %v233
        %303 = vmatprep.subr.mxu0 0.0
        %304 = vmatpush2.msra.mxu0 0.0
        %305 = vmatprep.subr.mxu0 0.0
        %306 = vmatpush2.msra.mxu0 0.0
        %307 = vmatprep.subr.mxu0 0.0
        %308 = vmatpush2.msra.mxu0 0.0
        %309 = vmatprep.subr.mxu0 0.0
        %310 = vmatpush2.msra.mxu0 0.0
        %311 = vmatprep.subr.mxu0 0.0
        %312 = vmatpush2.msra.mxu0 0.0
        %313 = vmatprep.subr.mxu0 0.0
        %314 = vmatpush2.msra.mxu0 0.0
        %315 = vmatprep.subr.mxu0 0.0
        %316 = vmatpush2.msra.mxu0 0.0
        %317 = vmatprep.subr.mxu0 0.0
        %318 = vmatpush2.msra.mxu0 0.0
        %319 = vmatprep.subr.mxu0 0.0
        %320 = vmatpush2.msra.mxu0 0.0
        %321 = vmatprep.subr.mxu0 0.0
        %322 = vmatpush2.msra.mxu0 0.0
        %323 = vmatprep.subr.mxu0 0.0
        %324 = vmatpush2.msra.mxu0 0.0
        %325 = vmatprep.subr.mxu0 0.0
        %326 = vmatpush2.msra.mxu0 0.0
        %327 = vmatprep.subr.mxu0 0.0
        %328 = vmatpush2.msra.mxu0 0.0
        %329 = vmatprep.subr.mxu0 0.0
        %330 = vmatpush2.msra.mxu0 0.0
        %331 = vmatprep.subr.mxu0 0.0
        %332 = vmatpush2.msra.mxu0 0.0
        %333 = vmatprep.subr.mxu0 0.0
        %334 = vmatpush2.msra.mxu0 0.0
        %335 = vmatprep.mubr.f32.mxu0 0.0
        %336 = vmatmul.mubr.f32.gmra.mxu0 %v244
        %v337 = vpop.f32.mrf.mxu0
        %v338 = vadd.f32 %v240, %v337
        %v339 = vpop.f32.mrf.mxu0
        %340 = vmatprep.mubr.f32.mxu0 0.0
        %341 = vmatmul.mubr.f32.gmra.mxu0 %v247
        %v342 = vpop.f32.mrf.mxu0
        %v343 = vadd.f32 %v240, %v342
        %v344 = vpop.f32.mrf.mxu0
        %345 = vmatprep.mubr.f32.mxu0 0.0
        %346 = vmatmul.mubr.f32.gmra.mxu0 %v250
        %v347 = vpop.f32.mrf.mxu0
        %v348 = vadd.f32 %v240, %v347
        %v349 = vpop.f32.mrf.mxu0
        %350 = vmatprep.mubr.f32.mxu0 0.0
        %351 = vmatmul.mubr.f32.gmra.mxu0 %v253
        %v352 = vpop.f32.mrf.mxu0
        %v353 = vadd.f32 %v240, %v352
        %v354 = vpop.f32.mrf.mxu0
        %355 = vmatprep.mubr.f32.mxu0 0.0
        %356 = vmatmul.mubr.f32.gmra.mxu0 %v256
        %v357 = vpop.f32.mrf.mxu0
        %v358 = vadd.f32 %v240, %v357
        %v359 = vpop.f32.mrf.mxu0
        %360 = vmatprep.mubr.f32.mxu0 0.0
        %361 = vmatmul.mubr.f32.gmra.mxu0 %v259
        %v362 = vpop.f32.mrf.mxu0
        %v363 = vadd.f32 %v240, %v362
        %v364 = vpop.f32.mrf.mxu0
        %365 = vmatprep.mubr.f32.mxu0 0.0
        %366 = vmatmul.mubr.f32.gmra.mxu0 %v262
        %v367 = vpop.f32.mrf.mxu0
        %v368 = vadd.f32 %v240, %v367
        %v369 = vpop.f32.mrf.mxu0
        %370 = vmatprep.mubr.f32.mxu0 0.0
        %371 = vmatmul.mubr.f32.gmra.mxu0 %v265
        %v372 = vpop.f32.mrf.mxu0
        %v373 = vadd.f32 %v240, %v372
        %v374 = vpop.f32.mrf.mxu0
        %375 = vdwg.mxu0
        %v376 = vxor.u32 %v338, 2147483648
        %v377 = vxor.u32 %v343, 2147483648
        %v378 = vxor.u32 %v348, 2147483648
        %v379 = vxor.u32 %v353, 2147483648
        %v380 = vxor.u32 %v358, 2147483648
        %v381 = vxor.u32 %v363, 2147483648
        %v382 = vxor.u32 %v368, 2147483648
        %v383 = vxor.u32 %v373, 2147483648
        %v384 = vmul.f32 %v376, 1.442695
        %v385 = vpow.pop %v384
        %v386 = vmul.f32 %v377, 1.442695
        %v387 = vpow.pop %v386
        %v388 = vmul.f32 %v378, 1.442695
        %v389 = vpow.pop %v388
        %v390 = vmul.f32 %v379, 1.442695
        %v391 = vpow.pop %v390
        %v392 = vmul.f32 %v380, 1.442695
        %v393 = vpow.pop %v392
        %v394 = vmul.f32 %v381, 1.442695
        %v395 = vpow.pop %v394
        %v396 = vmul.f32 %v382, 1.442695
        %v397 = vpow.pop %v396
        %v398 = vmul.f32 %v383, 1.442695
        %v399 = vpow.pop %v398
        %v400 = vadd.f32 %v385, 1.0
        %v401 = vadd.f32 %v387, 1.0
        %v402 = vadd.f32 %v389, 1.0
        %v403 = vadd.f32 %v391, 1.0
        %v404 = vadd.f32 %v393, 1.0
        %v405 = vadd.f32 %v395, 1.0
        %v406 = vadd.f32 %v397, 1.0
        %v407 = vadd.f32 %v399, 1.0
        %v408 = vrcp.pop %v400
        %v409 = vmul.f32 1.0, %v408
        %v410 = vrcp.pop %v401
        %v411 = vmul.f32 1.0, %v410
        %v412 = vrcp.pop %v402
        %v413 = vmul.f32 1.0, %v412
        %v414 = vrcp.pop %v403
        %v415 = vmul.f32 1.0, %v414
        %v416 = vrcp.pop %v404
        %v417 = vmul.f32 1.0, %v416
        %v418 = vrcp.pop %v405
        %v419 = vmul.f32 1.0, %v418
        %v420 = vrcp.pop %v406
        %v421 = vmul.f32 1.0, %v420
        %v422 = vrcp.pop %v407
        %v423 = vmul.f32 1.0, %v422
        %v424 = vld [vmem:[%s3] sm:$0x1]
        %s425 = sld [smem:[#allocation2]]
        %v426 = vstv %s425
        %vm427 = vcmask 818176
        %v429 = vsel %vm427, %v424, 0
        %v432 = vsel %vm427, %v409, 0
        %v435 = vsel %vm427, %v411, 0
        %v438 = vsel %vm427, %v413, 0
        %v441 = vsel %vm427, %v415, 0
        %v444 = vsel %vm427, %v417, 0
        %v447 = vsel %vm427, %v419, 0
        %v450 = vsel %vm427, %v421, 0
        %v453 = vsel %vm427, %v423, 0
        %455 = vmatprep.subr.mxu0 0.0
        %456 = vmatpush1.xpose.msra.mxu0 0.0
        %457 = vmatprep.subr.mxu0 0.0
        %458 = vmatpush1.xpose.msra.mxu0 0.0
        %459 = vmatprep.subr.mxu0 0.0
        %460 = vmatpush1.xpose.msra.mxu0 0.0
        %461 = vmatprep.subr.mxu0 0.0
        %462 = vmatpush1.xpose.msra.mxu0 0.0
        %463 = vmatprep.subr.mxu0 0.0
        %464 = vmatpush1.xpose.msra.mxu0 0.0
        %465 = vmatprep.subr.mxu0 0.0
        %466 = vmatpush1.xpose.msra.mxu0 0.0
        %467 = vmatprep.subr.mxu0 0.0
        %468 = vmatpush1.xpose.msra.mxu0 0.0
        %469 = vmatprep.subr.mxu0 0.0
        %470 = vmatpush1.xpose.msra.mxu0 0.0
        %471 = vmatprep.subr.mxu0 0.0
        %472 = vmatpush1.xpose.msra.mxu0 %v453
        %473 = vmatprep.subr.mxu0 0.0
        %474 = vmatpush1.xpose.msra.mxu0 %v450
        %475 = vmatprep.subr.mxu0 0.0
        %476 = vmatpush1.xpose.msra.mxu0 %v447
        %477 = vmatprep.subr.mxu0 0.0
        %478 = vmatpush1.xpose.msra.mxu0 %v444
        %479 = vmatprep.subr.mxu0 0.0
        %480 = vmatpush1.xpose.msra.mxu0 %v441
        %481 = vmatprep.subr.mxu0 0.0
        %482 = vmatpush1.xpose.msra.mxu0 %v438
        %483 = vmatprep.subr.mxu0 0.0
        %484 = vmatpush1.xpose.msra.mxu0 %v435
        %485 = vmatprep.subr.mxu0 0.0
        %486 = vmatpush1.xpose.msra.mxu0 %v432
        %487 = vmatprep.subr.mxu0 0.0
        %488 = vmatpush2.xpose.msra.mxu0 0.0
        %489 = vmatprep.subr.mxu0 0.0
        %490 = vmatpush2.xpose.msra.mxu0 0.0
        %491 = vmatprep.subr.mxu0 0.0
        %492 = vmatpush2.xpose.msra.mxu0 0.0
        %493 = vmatprep.subr.mxu0 0.0
        %494 = vmatpush2.xpose.msra.mxu0 0.0
        %495 = vmatprep.subr.mxu0 0.0
        %496 = vmatpush2.xpose.msra.mxu0 0.0
        %497 = vmatprep.subr.mxu0 0.0
        %498 = vmatpush2.xpose.msra.mxu0 0.0
        %499 = vmatprep.subr.mxu0 0.0
        %500 = vmatpush2.xpose.msra.mxu0 0.0
        %501 = vmatprep.subr.mxu0 0.0
        %502 = vmatpush2.xpose.msra.mxu0 0.0
        %503 = vmatprep.subr.mxu0 0.0
        %504 = vmatpush2.xpose.msra.mxu0 0.0
        %505 = vmatprep.subr.mxu0 0.0
        %506 = vmatpush2.xpose.msra.mxu0 0.0
        %507 = vmatprep.subr.mxu0 0.0
        %508 = vmatpush2.xpose.msra.mxu0 0.0
        %509 = vmatprep.subr.mxu0 0.0
        %510 = vmatpush2.xpose.msra.mxu0 0.0
        %511 = vmatprep.subr.mxu0 0.0
        %512 = vmatpush2.xpose.msra.mxu0 0.0
        %513 = vmatprep.subr.mxu0 0.0
        %514 = vmatpush2.xpose.msra.mxu0 0.0
        %515 = vmatprep.subr.mxu0 0.0
        %516 = vmatpush2.xpose.msra.mxu0 0.0
        %517 = vmatprep.subr.mxu0 0.0
        %518 = vmatpush2.xpose.msra.mxu0 0.0
        %519 = vmatprep.mubr.f32.mxu0 0.0
        %520 = vmatmul.mubr.f32.gmra.mxu0 %v429
        %v521 = vpop.f32.mrf.mxu0
        %v522 = vadd.f32 %v426, %v521
        %v523 = vpop.f32.mrf.mxu0
        %524 = vdwg.mxu0
        %vm525 = vcmask 516096
        %526 = vst.msk [vmem:[%s218] sm:$0x1] %vm525, %v522
        %s527 = sand.u32 %s138, 1
        %s528 = scalar_lea.sflag [#allocation4], %s527
        %s529 = sand.u32 %s138, 1
        %s530 = scalar_lea.vmem [#allocation3], %s529
        // Predicated region
        $region41: #{tpu_custom_call.1} parent=39 // pred_check
          %p531 = pneg %p148
        $region42: #{tpu_custom_call.1} parent=39 // pred_check_branch
          %533 = sbr.rel (%p531) target = $region44
        $region43: #{tpu_custom_call.1} parent=39 // pred_region
          %s535 = ssub.s32 16, 16
          %536 = vsyncadd %s528, %s535
          %s537 = smul.addr %s20, 16
          %s538 = scalar_lea.hbm %s5, %s537
          %s540 = sshll.u32 %s530, 4
          %s541 = int_to_ptr.vmem [resolvable:$true] %s540
          %543 = dma.vmem_to_hbm [thread:$0]  %s541, 16, %s538, %s528
        $region44: #{tpu_custom_call.1} parent=39 // pred_fallthru
          _
      $region40: #{tpu_custom_call.1} parent=5 // pred_fallthru
        _
      %p544 = scmp.le.s32.totalorder 2, %s15
      // Predicated region
      $region45: #{tpu_custom_call.1} parent=5 // pred_check
        %p545 = pneg %p544
      $region46: #{tpu_custom_call.1} parent=5 // pred_check_branch
        %547 = sbr.rel (%p545) target = $region48
      $region47: #{tpu_custom_call.1} parent=5 // pred_region
        %s548 = ssub.s32 %s15, 2
        // Predicated region
        $region49: #{tpu_custom_call.1} parent=47 // pred_check
          %p549 = pneg %p154
        $region50: #{tpu_custom_call.1} parent=47 // pred_check_branch
          %551 = sbr.rel (%p549) target = $region52
        $region51: #{tpu_custom_call.1} parent=47 // pred_region
          %s552 = sand.u32 %s139, 1
          %s553 = scalar_lea.sflag [#allocation4], %s552
          %s554 = sand.u32 %s139, 1
          %s555 = scalar_lea.vmem [#allocation3], %s554
          %556 = dma.done %s553, 16
        $region52: #{tpu_custom_call.1} parent=47 // pred_fallthru
          _
      $region48: #{tpu_custom_call.1} parent=5 // pred_fallthru
        _
    $region6: #{tpu_custom_call.1} parent=1 // loop_footer
      %s19 = sadd.s32 1, %s15
    $region7: #{tpu_custom_call.1} parent=1 // loop_footer_branch
      %14 = sbr.rel target = $region3
    $region8: #{tpu_custom_call.1} parent=1 // loop_exit
      _
    %557 = vsyncpa [#allocation4], 1
    %s558 = scalar_lea.sflag [#allocation4], 1
    %559 = vsyncpa %s558, 1

</llo_original>
